<compile_context>
chip_gen: v7x
topology: tpu7x:2x2x1
jax: 0.10.0
libtpu: 0.0.40
codegen_flags: <defaults>
</compile_context>

<pallas_src>
import jax
import jax.numpy as jnp
from jax.experimental import pallas as pl
from jax.experimental.pallas import tpu as pltpu

HIDDEN = 128
LANE = 128  # output features are zero-padded up to a multiple of this


def _round_up(n, m):
    return ((n + m - 1) // m) * m


def _choose_tm(b_rows, cap=2048):
    """Fewest grid steps, but >=2 tiles when the batch allows (v7x megacore)."""
    if b_rows <= 8:
        return 8
    half = _round_up(pl.cdiv(b_rows, 2), 8)
    return min(cap, half)


def qnetwork_kernel(x_ref, w1_ref, b1_ref, w2_ref, b2_ref, w3_ref, b3_ref,
                    out_ref):
    # fc1 + ReLU: f32 LHS and f32 weights (K is tiny -> negligible MXU cost);
    # avoids bf16-quantizing raw observations.
    h1 = jnp.dot(x_ref[...], w1_ref[...], preferred_element_type=jnp.float32)
    h1 = jnp.maximum(h1 + b1_ref[...], 0.0)

    # fc2 + ReLU: bf16 MXU operands, f32 accumulation / epilogue (v5e-safe).
    h2 = jnp.dot(h1.astype(jnp.bfloat16), w2_ref[...],
                 preferred_element_type=jnp.float32)
    h2 = jnp.maximum(h2 + b2_ref[...], 0.0)

    # fc3 (no activation); output block is lane-dense (width multiple of 128).
    # The store narrows to out_ref.dtype (bf16 by default) as the final cast.
    q = jnp.dot(h2.astype(jnp.bfloat16), w3_ref[...],
                preferred_element_type=jnp.float32)
    out_ref[...] = (q + b3_ref[...]).astype(out_ref.dtype)


def qnetwork_forward(x, kparams, *, tm=None, out_dtype=jnp.bfloat16):
    """x: [B, state_size]. kparams: prepared (padded) params.

    Returns the lane/sublane-padded output [b_rows, out_pad]; caller slices it.
    """
    w1, b1 = kparams["w1"], kparams["b1"]
    w2, b2 = kparams["w2"], kparams["b2"]
    w3, b3 = kparams["w3"], kparams["b3"]

    B, state_size = x.shape
    out_pad = w3.shape[1]  # already a multiple of 128

    # Pad only sub-sublane batches (B < 8) by at most 7 rows; any other ragged
    # last block is handled by Pallas masking (grid = cdiv), so no HBM copy.
    b_rows = max(B, 8)
    if b_rows != B:
        x = jnp.pad(x, ((0, b_rows - B), (0, 0)))

    if tm is None:
        tm = _choose_tm(b_rows)
    else:
        tm = max(8, min(_round_up(tm, 8), (b_rows // 8) * 8))
    grid = (pl.cdiv(b_rows, tm),)

    flops = 2 * b_rows * (state_size * HIDDEN + HIDDEN * HIDDEN
                          + HIDDEN * out_pad)
    bytes_accessed = (
        int(x.size) * x.dtype.itemsize                      # activations in
        + int(w1.size) * w1.dtype.itemsize                  # f32 fc1 weights
        + int(w2.size + w3.size) * 2                        # bf16 weights
        + int(b1.size + b2.size + b3.size) * 4              # f32 biases
        + b_rows * out_pad * jnp.dtype(out_dtype).itemsize  # output
    )

    return pl.pallas_call(
        qnetwork_kernel,
        out_shape=jax.ShapeDtypeStruct((b_rows, out_pad), out_dtype),
        grid=grid,
        in_specs=[
            pl.BlockSpec((tm, state_size), lambda i: (i, 0)),
            # Weights / biases: constant block index -> fetched once, stay VMEM-resident.
            pl.BlockSpec(w1.shape, lambda i: (0, 0)),
            pl.BlockSpec(b1.shape, lambda i: (0, 0)),
            pl.BlockSpec(w2.shape, lambda i: (0, 0)),
            pl.BlockSpec(b2.shape, lambda i: (0, 0)),
            pl.BlockSpec(w3.shape, lambda i: (0, 0)),
            pl.BlockSpec(b3.shape, lambda i: (0, 0)),
        ],
        out_specs=pl.BlockSpec((tm, out_pad), lambda i: (i, 0)),
        compiler_params=pltpu.CompilerParams(
            dimension_semantics=("parallel",)),
        cost_estimate=pl.CostEstimate(flops=flops, transcendentals=0,
                                      bytes_accessed=bytes_accessed),
    )(x, w1, b1, w2, b2, w3, b3)


def qnetwork_apply(x, kparams, action_size, **kwargs):
    out_full = qnetwork_forward(x, kparams, **kwargs)
    return out_full[: x.shape[0], :action_size]


def init_qnetwork_params(key, state_size, action_size, hidden=HIDDEN):
    """f32 master params mimicking nn.Linear default init U[-1/sqrt(fan_in), +].

    Weights stored as [in, out] == PyTorch weight.T; biases as [1, out] rows.
    """
    ks = jax.random.split(key, 6)

    def linear(kw, kb, fan_in, fan_out):
        bound = 1.0 / jnp.sqrt(jnp.float32(fan_in))
        w = jax.random.uniform(kw, (fan_in, fan_out), jnp.float32, -bound, bound)
        b = jax.random.uniform(kb, (1, fan_out), jnp.float32, -bound, bound)
        return w, b

    w1, b1 = linear(ks[0], ks[1], state_size, hidden)
    w2, b2 = linear(ks[2], ks[3], hidden, hidden)
    w3, b3 = linear(ks[4], ks[5], hidden, action_size)
    return {"w1": w1, "b1": b1, "w2": w2, "b2": b2, "w3": w3, "b3": b3}


def prepare_kernel_params(params):
    """Kernel-side params: f32 fc1 weights (precision on raw observations),
    bf16 fc2/fc3 weights (MXU-native), f32 biases, fc3 zero-padded to a
    lane-dense multiple of 128 output columns."""
    action_size = params["w3"].shape[1]
    out_pad = _round_up(action_size, LANE)
    w3 = jnp.pad(params["w3"], ((0, 0), (0, out_pad - action_size)))
    b3 = jnp.pad(params["b3"], ((0, 0), (0, out_pad - action_size)))
    return {
        "w1": params["w1"].astype(jnp.float32),
        "b1": params["b1"],
        "w2": params["w2"].astype(jnp.bfloat16),
        "b2": params["b2"],
        "w3": w3.astype(jnp.bfloat16),
        "b3": b3,
    }


def qnetwork_ref(x, p):
    h1 = jnp.maximum(x @ p["w1"] + p["b1"], 0.0)
    h2 = jnp.maximum(h1 @ p["w2"] + p["b2"], 0.0)
    return h2 @ p["w3"] + p["b3"]


if __name__ == "__main__":
    key = jax.random.PRNGKey(0)
    k_param, k_x1, k_x2 = jax.random.split(key, 3)

    state_size = 16
    action_size = 8

    params = init_qnetwork_params(k_param, state_size, action_size)
    kparams = prepare_kernel_params(params)

    # Case 1: tiny batch (B=2) -> single 8-row tile (sublane pad path).
    x_small = jax.random.normal(k_x1, (2, state_size), jnp.float32)
    out_small = jax.block_until_ready(qnetwork_apply(x_small, kparams, action_size))
    ref_small = qnetwork_ref(x_small, params)
    assert out_small.shape == (2, action_size)
    assert jnp.allclose(out_small.astype(jnp.float32), ref_small,
                        atol=3e-2, rtol=3e-2), "small-batch mismatch vs reference"

    # Case 2: mid batch (B=300, not a multiple of 8) -> 2 parallel tiles with a
    # ragged, masked last block (exercises the cdiv grid / no-pad path).
    x_big = jax.random.normal(k_x2, (300, state_size), jnp.float32)
    out_big = jax.block_until_ready(qnetwork_apply(x_big, kparams, action_size))
    ref_big = qnetwork_ref(x_big, params)
    assert out_big.shape == (300, action_size)
    assert jnp.allclose(out_big.astype(jnp.float32), ref_big,
                        atol=3e-2, rtol=3e-2), "mid-batch mismatch vs reference"

    print("KERNEL_OK")
</pallas_src>

<mosaic_0001>
module attributes {stable_mosaic.version = 11 : i64} {
  func.func @qnetwork_kernel(%arg0: i32, %arg1: memref<8x16xf32, #tpu.memory_space<vmem>>, %arg2: memref<16x128xf32, #tpu.memory_space<vmem>>, %arg3: memref<1x128xf32, #tpu.memory_space<vmem>>, %arg4: memref<128x128xbf16, #tpu.memory_space<vmem>>, %arg5: memref<1x128xf32, #tpu.memory_space<vmem>>, %arg6: memref<128x128xbf16, #tpu.memory_space<vmem>>, %arg7: memref<1x128xf32, #tpu.memory_space<vmem>>, %arg8: memref<8x128xbf16, #tpu.memory_space<vmem>>) attributes {dimension_semantics = [#tpu.dimension_semantics<parallel>], iteration_bounds = array<i64: 1>, scalar_prefetch = 0 : i64, scratch_operands = 0 : i64, tpu.core_type = #tpu.core_type<tc>, window_params = [{transform_indices = @transform_0, window_bounds = array<i64: 8, 16>}, {pipeline_mode = #tpu.pipeline_mode<synchronous>, transform_indices = @transform_1, window_bounds = array<i64: 16, 128>}, {pipeline_mode = #tpu.pipeline_mode<synchronous>, transform_indices = @transform_2, window_bounds = array<i64: 1, 128>}, {pipeline_mode = #tpu.pipeline_mode<synchronous>, transform_indices = @transform_3, window_bounds = array<i64: 128, 128>}, {pipeline_mode = #tpu.pipeline_mode<synchronous>, transform_indices = @transform_4, window_bounds = array<i64: 1, 128>}, {pipeline_mode = #tpu.pipeline_mode<synchronous>, transform_indices = @transform_5, window_bounds = array<i64: 128, 128>}, {pipeline_mode = #tpu.pipeline_mode<synchronous>, transform_indices = @transform_6, window_bounds = array<i64: 1, 128>}, {transform_indices = @transform_7, window_bounds = array<i64: 8, 128>}]} {
    %c0 = arith.constant 0 : index
    %c0_0 = arith.constant 0 : index
    %0 = vector.load %arg1[%c0, %c0_0] : memref<8x16xf32, #tpu.memory_space<vmem>>, vector<8x16xf32>
    %c0_1 = arith.constant 0 : index
    %c0_2 = arith.constant 0 : index
    %1 = vector.load %arg2[%c0_1, %c0_2] : memref<16x128xf32, #tpu.memory_space<vmem>>, vector<16x128xf32>
    %cst = arith.constant dense<0.000000e+00> : vector<8x128xf32>
    %2 = tpu.matmul %0, %1, %cst {dimension_numbers = #tpu.dot_dimension_numbers<[1], [0], [0], [1], [0, 0, 1, 1], [], []>} : vector<8x16xf32>, vector<16x128xf32>, vector<8x128xf32> -> vector<8x128xf32>
    %c0_3 = arith.constant 0 : index
    %c0_4 = arith.constant 0 : index
    %3 = vector.load %arg3[%c0_3, %c0_4] : memref<1x128xf32, #tpu.memory_space<vmem>>, vector<1x128xf32>
    %4 = vector.broadcast %3 : vector<1x128xf32> to vector<8x128xf32>
    %5 = arith.addf %2, %4 : vector<8x128xf32>
    %cst_5 = arith.constant 0.000000e+00 : f32
    %6 = vector.broadcast %cst_5 : f32 to vector<8x128xf32>
    %7 = arith.maximumf %5, %6 : vector<8x128xf32>
    %8 = arith.truncf %7 : vector<8x128xf32> to vector<8x128xbf16>
    %c0_6 = arith.constant 0 : index
    %c0_7 = arith.constant 0 : index
    %9 = vector.load %arg4[%c0_6, %c0_7] : memref<128x128xbf16, #tpu.memory_space<vmem>>, vector<128x128xbf16>
    %cst_8 = arith.constant dense<0.000000e+00> : vector<8x128xf32>
    %10 = tpu.matmul %8, %9, %cst_8 {dimension_numbers = #tpu.dot_dimension_numbers<[1], [0], [0], [1], [0, 0, 1, 1], [], []>} : vector<8x128xbf16>, vector<128x128xbf16>, vector<8x128xf32> -> vector<8x128xf32>
    %c0_9 = arith.constant 0 : index
    %c0_10 = arith.constant 0 : index
    %11 = vector.load %arg5[%c0_9, %c0_10] : memref<1x128xf32, #tpu.memory_space<vmem>>, vector<1x128xf32>
    %12 = vector.broadcast %11 : vector<1x128xf32> to vector<8x128xf32>
    %13 = arith.addf %10, %12 : vector<8x128xf32>
    %cst_11 = arith.constant 0.000000e+00 : f32
    %14 = vector.broadcast %cst_11 : f32 to vector<8x128xf32>
    %15 = arith.maximumf %13, %14 : vector<8x128xf32>
    %16 = arith.truncf %15 : vector<8x128xf32> to vector<8x128xbf16>
    %c0_12 = arith.constant 0 : index
    %c0_13 = arith.constant 0 : index
    %17 = vector.load %arg6[%c0_12, %c0_13] : memref<128x128xbf16, #tpu.memory_space<vmem>>, vector<128x128xbf16>
    %cst_14 = arith.constant dense<0.000000e+00> : vector<8x128xf32>
    %18 = tpu.matmul %16, %17, %cst_14 {dimension_numbers = #tpu.dot_dimension_numbers<[1], [0], [0], [1], [0, 0, 1, 1], [], []>} : vector<8x128xbf16>, vector<128x128xbf16>, vector<8x128xf32> -> vector<8x128xf32>
    %c0_15 = arith.constant 0 : index
    %c0_16 = arith.constant 0 : index
    %19 = vector.load %arg7[%c0_15, %c0_16] : memref<1x128xf32, #tpu.memory_space<vmem>>, vector<1x128xf32>
    %20 = vector.broadcast %19 : vector<1x128xf32> to vector<8x128xf32>
    %21 = arith.addf %18, %20 : vector<8x128xf32>
    %22 = arith.truncf %21 : vector<8x128xf32> to vector<8x128xbf16>
    %c0_17 = arith.constant 0 : index
    %c0_18 = arith.constant 0 : index
    %23 = vector.load %arg8[%c0_17, %c0_18] : memref<8x128xbf16, #tpu.memory_space<vmem>>, vector<8x128xbf16>
    tpu.vector_store %arg8[%c0_17, %c0_18], %22 {strides = array<i32>} : memref<8x128xbf16, #tpu.memory_space<vmem>>, vector<8x128xbf16>,
    return
  }
  func.func @transform_0(%arg0: i32) -> (i32, i32) {
    %c0_i32 = arith.constant 0 : i32
    %c0_i32_0 = arith.constant 0 : i32
    return %arg0, %c0_i32 : i32, i32
  }
  func.func @transform_1(%arg0: i32) -> (i32, i32) {
    %c0_i32 = arith.constant 0 : i32
    %c0_i32_0 = arith.constant 0 : i32
    %c0_i32_1 = arith.constant 0 : i32
    return %c0_i32, %c0_i32_0 : i32, i32
  }
  func.func @transform_2(%arg0: i32) -> (i32, i32) {
    %c0_i32 = arith.constant 0 : i32
    %c0_i32_0 = arith.constant 0 : i32
    %c0_i32_1 = arith.constant 0 : i32
    return %c0_i32, %c0_i32_0 : i32, i32
  }
  func.func @transform_3(%arg0: i32) -> (i32, i32) {
    %c0_i32 = arith.constant 0 : i32
    %c0_i32_0 = arith.constant 0 : i32
    %c0_i32_1 = arith.constant 0 : i32
    return %c0_i32, %c0_i32_0 : i32, i32
  }
  func.func @transform_4(%arg0: i32) -> (i32, i32) {
    %c0_i32 = arith.constant 0 : i32
    %c0_i32_0 = arith.constant 0 : i32
    %c0_i32_1 = arith.constant 0 : i32
    return %c0_i32, %c0_i32_0 : i32, i32
  }
  func.func @transform_5(%arg0: i32) -> (i32, i32) {
    %c0_i32 = arith.constant 0 : i32
    %c0_i32_0 = arith.constant 0 : i32
    %c0_i32_1 = arith.constant 0 : i32
    return %c0_i32, %c0_i32_0 : i32, i32
  }
  func.func @transform_6(%arg0: i32) -> (i32, i32) {
    %c0_i32 = arith.constant 0 : i32
    %c0_i32_0 = arith.constant 0 : i32
    %c0_i32_1 = arith.constant 0 : i32
    return %c0_i32, %c0_i32_0 : i32, i32
  }
  func.func @transform_7(%arg0: i32) -> (i32, i32) {
    %c0_i32 = arith.constant 0 : i32
    %c0_i32_0 = arith.constant 0 : i32
    return %arg0, %c0_i32 : i32, i32
  }
}

</mosaic_0001>

<llo_original>
// kernel: tpu_custom_call.1
$region0: #{tpu_custom_call.1}
  #allocation0 [shape = 'u32[]', space=smem, size = 0x4, offset = 0x4, fixed_abs, tag = 'smem constant byte address 0x4 - core index']
  #allocation1 [shape = 'u32[144,128]{1,0:T(1,128)}', space=vmem, size = 0x12000, scoped, tag = 'internal scratch']
  %s0 = inlined_call_operand.hbm [shape: f32[8,16], index: 0, kind: input, shape index: {}]
  %s1 = inlined_call_operand.hbm [shape: f32[16,128], index: 1, kind: input, shape index: {}]
  %s2 = inlined_call_operand.vmem [shape: f32[1,128], index: 2, kind: input, shape index: {}]
  %s3 = inlined_call_operand.hbm [shape: bf16[128,128], index: 3, kind: input, shape index: {}]
  %s4 = inlined_call_operand.vmem [shape: f32[1,128], index: 4, kind: input, shape index: {}]
  %s5 = inlined_call_operand.hbm [shape: bf16[128,128], index: 5, kind: input, shape index: {}]
  %s6 = inlined_call_operand.vmem [shape: f32[1,128], index: 6, kind: input, shape index: {}]
  %s7 = inlined_call_operand.hbm [shape: bf16[8,128], index: 7, kind: output, shape index: {}]
  %s8 = sld [smem:[#allocation0]]
  $region54: #{tpu_custom_call.1} parent=0
    _
  %s10 = ssub.s32 1, %s8
  %s11 = scalar_select 0, %s10, %s8
  $region1: #{tpu_custom_call.1} parent=0
    #allocation2 [shape = 'u8[4096]{0}', space=vmem, size = 0x1000, scoped, tag = 'input window, operand 0, single buffered']
    #allocation3 [shape = 's32[1]{0}', space=sflag, size = 0x4, scoped, tag = 'scoped memory for tpu_custom_call.1']
    #allocation4 [shape = 's32[1]{0}', space=sflag, size = 0x4, scoped, tag = 'scoped memory for tpu_custom_call.1']
    #allocation5 [shape = 'u8[8192]{0}', space=vmem, size = 0x2000, scoped, tag = 'input window, operand 1, single buffered']
    #allocation6 [shape = 's32[1]{0}', space=sflag, size = 0x4, scoped, tag = 'scoped memory for tpu_custom_call.1']
    #allocation7 [shape = 'u8[32768]{0}', space=vmem, size = 0x8000, scoped, tag = 'input window, operand 3, single buffered']
    #allocation8 [shape = 'u8[32768]{0}', space=vmem, size = 0x8000, scoped, tag = 'input window, operand 5, single buffered']
    #allocation9 [shape = 's32[1]{0}', space=sflag, size = 0x4, scoped, tag = 'scoped memory for tpu_custom_call.1']
    #allocation10 [shape = 'u8[2048]{0}', space=vmem, size = 0x800, scoped, tag = 'output window, operand 0, single buffered']
    %12 = vsyncpa [#allocation3], 0
    %13 = vsyncpa [#allocation6], 0
    %14 = vsyncpa [#allocation9], 0
    %15 = vsyncpa [#allocation4], 0
    // Predicated region
    $region2: #{tpu_custom_call.1} parent=1 // pred_check
      _
    $region3: #{tpu_custom_call.1} parent=1 // pred_check_branch
      %17 = sbr.rel (0) target = $region5
    $region4: #{tpu_custom_call.1} parent=1 // pred_region
      %s19 = ssub.s32 128, 128
      %20 = vsyncadd [#allocation3], %s19
      %s22 = sshll.u32 [#allocation2], 4
      %s23 = int_to_ptr.vmem [resolvable:$true] %s22
      %25 = dma.hbm_to_vmem [thread:$0]  %s0, 128, %s23, [#allocation3]
    $region5: #{tpu_custom_call.1} parent=1 // pred_fallthru
      _
    // Predicated region
    $region6: #{tpu_custom_call.1} parent=1 // pred_check
      _
    $region7: #{tpu_custom_call.1} parent=1 // pred_check_branch
      %27 = sbr.rel (0) target = $region9
    $region8: #{tpu_custom_call.1} parent=1 // pred_region
      %s29 = ssub.s32 256, 256
      %30 = vsyncadd [#allocation6], %s29
      %s31 = sshll.u32 [#allocation5], 4
      %s32 = int_to_ptr.vmem [resolvable:$true] %s31
      %37 = dma.hbm_to_vmem [thread:$0]  %s1, 256, %s32, [#allocation6], 128, 128, 8
    $region9: #{tpu_custom_call.1} parent=1 // pred_fallthru
      _
    // Predicated region
    $region10: #{tpu_custom_call.1} parent=1 // pred_check
      _
    $region11: #{tpu_custom_call.1} parent=1 // pred_check_branch
      %39 = sbr.rel (0) target = $region13
    $region12: #{tpu_custom_call.1} parent=1 // pred_region
      _
    $region13: #{tpu_custom_call.1} parent=1 // pred_fallthru
      _
    // Predicated region
    $region14: #{tpu_custom_call.1} parent=1 // pred_check
      _
    $region15: #{tpu_custom_call.1} parent=1 // pred_check_branch
      %41 = sbr.rel (0) target = $region17
    $region16: #{tpu_custom_call.1} parent=1 // pred_region
      %s43 = ssub.s32 1024, 1024
      %44 = vsyncadd [#allocation6], %s43
      %s45 = sshll.u32 [#allocation7], 4
      %s46 = int_to_ptr.vmem [resolvable:$true] %s45
      %51 = dma.hbm_to_vmem [thread:$0]  %s3, 1024, %s46, [#allocation6], 64, 64, 4
    $region17: #{tpu_custom_call.1} parent=1 // pred_fallthru
      _
    // Predicated region
    $region18: #{tpu_custom_call.1} parent=1 // pred_check
      _
    $region19: #{tpu_custom_call.1} parent=1 // pred_check_branch
      %53 = sbr.rel (0) target = $region21
    $region20: #{tpu_custom_call.1} parent=1 // pred_region
      _
    $region21: #{tpu_custom_call.1} parent=1 // pred_fallthru
      _
    // Predicated region
    $region22: #{tpu_custom_call.1} parent=1 // pred_check
      _
    $region23: #{tpu_custom_call.1} parent=1 // pred_check_branch
      %55 = sbr.rel (0) target = $region25
    $region24: #{tpu_custom_call.1} parent=1 // pred_region
      %s57 = ssub.s32 1024, 1024
      %58 = vsyncadd [#allocation9], %s57
      %s59 = sshll.u32 [#allocation8], 4
      %s60 = int_to_ptr.vmem [resolvable:$true] %s59
      %65 = dma.hbm_to_vmem [thread:$0]  %s5, 1024, %s60, [#allocation9], 64, 64, 4
    $region25: #{tpu_custom_call.1} parent=1 // pred_fallthru
      _
    // Predicated region
    $region26: #{tpu_custom_call.1} parent=1 // pred_check
      _
    $region27: #{tpu_custom_call.1} parent=1 // pred_check_branch
      %67 = sbr.rel (0) target = $region29
    $region28: #{tpu_custom_call.1} parent=1 // pred_region
      _
    $region29: #{tpu_custom_call.1} parent=1 // pred_fallthru
      _
    // Predicated region
    $region30: #{tpu_custom_call.1} parent=1 // pred_check
      _
    $region31: #{tpu_custom_call.1} parent=1 // pred_check_branch
      %69 = sbr.rel (0) target = $region33
    $region32: #{tpu_custom_call.1} parent=1 // pred_region
      %70 = dma.done [#allocation3], 128
    $region33: #{tpu_custom_call.1} parent=1 // pred_fallthru
      _
    // Predicated region
    $region34: #{tpu_custom_call.1} parent=1 // pred_check
      _
    $region35: #{tpu_custom_call.1} parent=1 // pred_check_branch
      %72 = sbr.rel (0) target = $region37
    $region36: #{tpu_custom_call.1} parent=1 // pred_region
      %73 = dma.done [#allocation6], 256
    $region37: #{tpu_custom_call.1} parent=1 // pred_fallthru
      _
    // Predicated region
    $region38: #{tpu_custom_call.1} parent=1 // pred_check
      _
    $region39: #{tpu_custom_call.1} parent=1 // pred_check_branch
      %75 = sbr.rel (0) target = $region41
    $region40: #{tpu_custom_call.1} parent=1 // pred_region
      %76 = dma.done [#allocation6], 1024
    $region41: #{tpu_custom_call.1} parent=1 // pred_fallthru
      _
    // Predicated region
    $region42: #{tpu_custom_call.1} parent=1 // pred_check
      _
    $region43: #{tpu_custom_call.1} parent=1 // pred_check_branch
      %78 = sbr.rel (0) target = $region45
    $region44: #{tpu_custom_call.1} parent=1 // pred_region
      %79 = dma.done [#allocation9], 1024
    $region45: #{tpu_custom_call.1} parent=1 // pred_fallthru
      _
    %v81 = vld [vmem:[#allocation2] sm:$0xff]
    %v82 = vld [vmem:[#allocation5] sm:$0xff]
    %v83 = vld [vmem:[#allocation5 + $0x8] sm:$0xff]
    %v84 = vld [vmem:[%s2] sm:$0x1]
    %v86 = vlaneseq
    %v87 = vshrl.u32 %v86, 7
    %v88 = vsub.s32 0, %v87
    %v89 = vrot.slane %v84, %v88
    %vm91 = vcmask 130048
    %v93 = vsel %vm91, %v81, 0
    %95 = vmatprep.subr.mxu0 0.0
    %96 = vmatpush1.msra.mxu0 %v82
    %97 = vmatprep.subr.mxu0 0.0
    %98 = vmatpush1.msra.mxu0 %v83
    %99 = vmatprep.subr.mxu0 0.0
    %100 = vmatpush1.msra.mxu0 0.0
    %101 = vmatprep.subr.mxu0 0.0
    %102 = vmatpush1.msra.mxu0 0.0
    %103 = vmatprep.subr.mxu0 0.0
    %104 = vmatpush1.msra.mxu0 0.0
    %105 = vmatprep.subr.mxu0 0.0
    %106 = vmatpush1.msra.mxu0 0.0
    %107 = vmatprep.subr.mxu0 0.0
    %108 = vmatpush1.msra.mxu0 0.0
    %109 = vmatprep.subr.mxu0 0.0
    %110 = vmatpush1.msra.mxu0 0.0
    %111 = vmatprep.subr.mxu0 0.0
    %112 = vmatpush1.msra.mxu0 0.0
    %113 = vmatprep.subr.mxu0 0.0
    %114 = vmatpush1.msra.mxu0 0.0
    %115 = vmatprep.subr.mxu0 0.0
    %116 = vmatpush1.msra.mxu0 0.0
    %117 = vmatprep.subr.mxu0 0.0
    %118 = vmatpush1.msra.mxu0 0.0
    %119 = vmatprep.subr.mxu0 0.0
    %120 = vmatpush1.msra.mxu0 0.0
    %121 = vmatprep.subr.mxu0 0.0
    %122 = vmatpush1.msra.mxu0 0.0
    %123 = vmatprep.subr.mxu0 0.0
    %124 = vmatpush1.msra.mxu0 0.0
    %125 = vmatprep.subr.mxu0 0.0
    %126 = vmatpush1.msra.mxu0 0.0
    %127 = vmatprep.subr.mxu0 0.0
    %128 = vmatpush1.msra.mxu0 0.0
    %129 = vmatprep.subr.mxu0 0.0
    %130 = vmatpush1.msra.mxu0 0.0
    %131 = vmatprep.subr.mxu0 0.0
    %132 = vmatpush1.msra.mxu0 0.0
    %133 = vmatprep.subr.mxu0 0.0
    %134 = vmatpush1.msra.mxu0 0.0
    %135 = vmatprep.subr.mxu0 0.0
    %136 = vmatpush1.msra.mxu0 0.0
    %137 = vmatprep.subr.mxu0 0.0
    %138 = vmatpush1.msra.mxu0 0.0
    %139 = vmatprep.subr.mxu0 0.0
    %140 = vmatpush1.msra.mxu0 0.0
    %141 = vmatprep.subr.mxu0 0.0
    %142 = vmatpush1.msra.mxu0 0.0
    %143 = vmatprep.subr.mxu0 0.0
    %144 = vmatpush1.msra.mxu0 0.0
    %145 = vmatprep.subr.mxu0 0.0
    %146 = vmatpush1.msra.mxu0 0.0
    %147 = vmatprep.subr.mxu0 0.0
    %148 = vmatpush1.msra.mxu0 0.0
    %149 = vmatprep.subr.mxu0 0.0
    %150 = vmatpush1.msra.mxu0 0.0
    %151 = vmatprep.subr.mxu0 0.0
    %152 = vmatpush1.msra.mxu0 0.0
    %153 = vmatprep.subr.mxu0 0.0
    %154 = vmatpush1.msra.mxu0 0.0
    %155 = vmatprep.subr.mxu0 0.0
    %156 = vmatpush1.msra.mxu0 0.0
    %157 = vmatprep.subr.mxu0 0.0
    %158 = vmatpush1.msra.mxu0 0.0
    %159 = vmatprep.mubr.f32.mxu0 0.0
    %160 = vmatmul.mubr.f32.gmra.mrb[0].mxu0 %v93
    %v161 = vpop.f32.mrb[0].mxu0
    %v162 = vadd.f32 %v89, %v161
    %v163 = vpop.f32.mrb[0].mxu0
    %164 = vdwg.mxu0
    %v165 = vmax.f32 %v162, 0.0
    %v166 = vpack.c.bf16 %v165, %v165
    %v167 = vld [vmem:[#allocation7] sm:$0xf]
    %v168 = vld [vmem:[#allocation7 + $0x4] sm:$0xf]
    %v169 = vld [vmem:[#allocation7 + $0x8] sm:$0xf]
    %v170 = vld [vmem:[#allocation7 + $0xc] sm:$0xf]
    %v171 = vld [vmem:[#allocation7 + $0x10] sm:$0xf]
    %v172 = vld [vmem:[#allocation7 + $0x14] sm:$0xf]
    %v173 = vld [vmem:[#allocation7 + $0x18] sm:$0xf]
    %v174 = vld [vmem:[#allocation7 + $0x1c] sm:$0xf]
    %v175 = vld [vmem:[#allocation7 + $0x20] sm:$0xf]
    %v176 = vld [vmem:[#allocation7 + $0x24] sm:$0xf]
    %v177 = vld [vmem:[#allocation7 + $0x28] sm:$0xf]
    %v178 = vld [vmem:[#allocation7 + $0x2c] sm:$0xf]
    %v179 = vld [vmem:[#allocation7 + $0x30] sm:$0xf]
    %v180 = vld [vmem:[#allocation7 + $0x34] sm:$0xf]
    %v181 = vld [vmem:[#allocation7 + $0x38] sm:$0xf]
    %v182 = vld [vmem:[#allocation7 + $0x3c] sm:$0xf]
    %v183 = vld [vmem:[%s4] sm:$0x1]
    %v185 = vlaneseq
    %v186 = vshrl.u32 %v185, 7
    %v187 = vsub.s32 0, %v186
    %v188 = vrot.slane %v183, %v187
    %v206 = vunpack.c.l.b16 %v167
    %v207 = vunpack.c.l.b16 %v168
    %v208 = vunpack.c.l.b16 %v169
    %v209 = vunpack.c.l.b16 %v170
    %v210 = vunpack.c.l.b16 %v171
    %v211 = vunpack.c.l.b16 %v172
    %v212 = vunpack.c.l.b16 %v173
    %v213 = vunpack.c.l.b16 %v174
    %v214 = vunpack.c.l.b16 %v175
    %v215 = vunpack.c.l.b16 %v176
    %v216 = vunpack.c.l.b16 %v177
    %v217 = vunpack.c.l.b16 %v178
    %v218 = vunpack.c.l.b16 %v179
    %v219 = vunpack.c.l.b16 %v180
    %v220 = vunpack.c.l.b16 %v181
    %v221 = vunpack.c.l.b16 %v182
    %v222 = vpack.c.b16 %v207, %v206
    %v223 = vpack.c.b16 %v209, %v208
    %v224 = vpack.c.b16 %v211, %v210
    %v225 = vpack.c.b16 %v213, %v212
    %v226 = vpack.c.b16 %v215, %v214
    %v227 = vpack.c.b16 %v217, %v216
    %v228 = vpack.c.b16 %v219, %v218
    %v229 = vpack.c.b16 %v221, %v220
    %238 = vmatprep.subr.bf16.mxu0 0
    %239 = vmatpush1.bf16.msra.mxu0 %v222
    %240 = vmatprep.subr.bf16.mxu0 0
    %241 = vmatpush1.bf16.msra.mxu0 %v223
    %242 = vmatprep.subr.bf16.mxu0 0
    %243 = vmatpush1.bf16.msra.mxu0 %v224
    %244 = vmatprep.subr.bf16.mxu0 0
    %245 = vmatpush1.bf16.msra.mxu0 %v225
    %246 = vmatprep.subr.bf16.mxu0 0
    %247 = vmatpush1.bf16.msra.mxu0 %v226
    %248 = vmatprep.subr.bf16.mxu0 0
    %249 = vmatpush1.bf16.msra.mxu0 %v227
    %250 = vmatprep.subr.bf16.mxu0 0
    %251 = vmatpush1.bf16.msra.mxu0 %v228
    %252 = vmatprep.subr.bf16.mxu0 0
    %253 = vmatpush1.bf16.msra.mxu0 %v229
    %254 = vmatprep.subr.bf16.mxu0 0
    %255 = vmatpush1.bf16.msra.mxu0 0
    %256 = vmatprep.subr.bf16.mxu0 0
    %257 = vmatpush1.bf16.msra.mxu0 0
    %258 = vmatprep.subr.bf16.mxu0 0
    %259 = vmatpush1.bf16.msra.mxu0 0
    %260 = vmatprep.subr.bf16.mxu0 0
    %261 = vmatpush1.bf16.msra.mxu0 0
    %262 = vmatprep.subr.bf16.mxu0 0
    %263 = vmatpush1.bf16.msra.mxu0 0
    %264 = vmatprep.subr.bf16.mxu0 0
    %265 = vmatpush1.bf16.msra.mxu0 0
    %266 = vmatprep.subr.bf16.mxu0 0
    %267 = vmatpush1.bf16.msra.mxu0 0
    %268 = vmatprep.subr.bf16.mxu0 0
    %269 = vmatpush1.bf16.msra.mxu0 0
    %270 = vmatprep.mubr.bf16.mxu0 0
    %271 = vmatmul.mubr.bf16.gmra.mrb[0].mxu0 %v166
    %v272 = vpop.f32.mrb[0].mxu0
    %v273 = vadd.f32 %v188, %v272
    %v274 = vpop.f32.mrb[0].mxu0
    %v275 = vpop.f32.mrb[0].mxu0
    %v276 = vpop.f32.mrb[0].mxu0
    %277 = vdwg.mxu0
    %v278 = vmax.f32 %v273, 0.0
    %v279 = vpack.c.bf16 %v278, %v278
    %v280 = vld [vmem:[#allocation8] sm:$0xf]
    %v281 = vld [vmem:[#allocation8 + $0x4] sm:$0xf]
    %v282 = vld [vmem:[#allocation8 + $0x8] sm:$0xf]
    %v283 = vld [vmem:[#allocation8 + $0xc] sm:$0xf]
    %v284 = vld [vmem:[#allocation8 + $0x10] sm:$0xf]
    %v285 = vld [vmem:[#allocation8 + $0x14] sm:$0xf]
    %v286 = vld [vmem:[#allocation8 + $0x18] sm:$0xf]
    %v287 = vld [vmem:[#allocation8 + $0x1c] sm:$0xf]
    %v288 = vld [vmem:[#allocation8 + $0x20] sm:$0xf]
    %v289 = vld [vmem:[#allocation8 + $0x24] sm:$0xf]
    %v290 = vld [vmem:[#allocation8 + $0x28] sm:$0xf]
    %v291 = vld [vmem:[#allocation8 + $0x2c] sm:$0xf]
    %v292 = vld [vmem:[#allocation8 + $0x30] sm:$0xf]
    %v293 = vld [vmem:[#allocation8 + $0x34] sm:$0xf]
    %v294 = vld [vmem:[#allocation8 + $0x38] sm:$0xf]
    %v295 = vld [vmem:[#allocation8 + $0x3c] sm:$0xf]
    %v296 = vld [vmem:[%s6] sm:$0x1]
    %v298 = vlaneseq
    %v299 = vshrl.u32 %v298, 7
    %v300 = vsub.s32 0, %v299
    %v301 = vrot.slane %v296, %v300
    %v319 = vunpack.c.l.b16 %v280
    %v320 = vunpack.c.l.b16 %v281
    %v321 = vunpack.c.l.b16 %v282
    %v322 = vunpack.c.l.b16 %v283
    %v323 = vunpack.c.l.b16 %v284
    %v324 = vunpack.c.l.b16 %v285
    %v325 = vunpack.c.l.b16 %v286
    %v326 = vunpack.c.l.b16 %v287
    %v327 = vunpack.c.l.b16 %v288
    %v328 = vunpack.c.l.b16 %v289
    %v329 = vunpack.c.l.b16 %v290
    %v330 = vunpack.c.l.b16 %v291
    %v331 = vunpack.c.l.b16 %v292
    %v332 = vunpack.c.l.b16 %v293
    %v333 = vunpack.c.l.b16 %v294
    %v334 = vunpack.c.l.b16 %v295
    %v335 = vpack.c.b16 %v320, %v319
    %v336 = vpack.c.b16 %v322, %v321
    %v337 = vpack.c.b16 %v324, %v323
    %v338 = vpack.c.b16 %v326, %v325
    %v339 = vpack.c.b16 %v328, %v327
    %v340 = vpack.c.b16 %v330, %v329
    %v341 = vpack.c.b16 %v332, %v331
    %v342 = vpack.c.b16 %v334, %v333
    %351 = vmatprep.subr.bf16.mxu0 0
    %352 = vmatpush1.bf16.msra.mxu0 %v335
    %353 = vmatprep.subr.bf16.mxu0 0
    %354 = vmatpush1.bf16.msra.mxu0 %v336
    %355 = vmatprep.subr.bf16.mxu0 0
    %356 = vmatpush1.bf16.msra.mxu0 %v337
    %357 = vmatprep.subr.bf16.mxu0 0
    %358 = vmatpush1.bf16.msra.mxu0 %v338
    %359 = vmatprep.subr.bf16.mxu0 0
    %360 = vmatpush1.bf16.msra.mxu0 %v339
    %361 = vmatprep.subr.bf16.mxu0 0
    %362 = vmatpush1.bf16.msra.mxu0 %v340
    %363 = vmatprep.subr.bf16.mxu0 0
    %364 = vmatpush1.bf16.msra.mxu0 %v341
    %365 = vmatprep.subr.bf16.mxu0 0
    %366 = vmatpush1.bf16.msra.mxu0 %v342
    %367 = vmatprep.subr.bf16.mxu0 0
    %368 = vmatpush1.bf16.msra.mxu0 0
    %369 = vmatprep.subr.bf16.mxu0 0
    %370 = vmatpush1.bf16.msra.mxu0 0
    %371 = vmatprep.subr.bf16.mxu0 0
    %372 = vmatpush1.bf16.msra.mxu0 0
    %373 = vmatprep.subr.bf16.mxu0 0
    %374 = vmatpush1.bf16.msra.mxu0 0
    %375 = vmatprep.subr.bf16.mxu0 0
    %376 = vmatpush1.bf16.msra.mxu0 0
    %377 = vmatprep.subr.bf16.mxu0 0
    %378 = vmatpush1.bf16.msra.mxu0 0
    %379 = vmatprep.subr.bf16.mxu0 0
    %380 = vmatpush1.bf16.msra.mxu0 0
    %381 = vmatprep.subr.bf16.mxu0 0
    %382 = vmatpush1.bf16.msra.mxu0 0
    %383 = vmatprep.mubr.bf16.mxu0 0
    %384 = vmatmul.mubr.bf16.gmra.mrb[0].mxu0 %v279
    %v385 = vpop.f32.mrb[0].mxu0
    %v386 = vadd.f32 %v301, %v385
    %v387 = vpop.f32.mrb[0].mxu0
    %v388 = vpop.f32.mrb[0].mxu0
    %v389 = vpop.f32.mrb[0].mxu0
    %390 = vdwg.mxu0
    %v391 = vpack.c.bf16 %v386, %v386
    %392 = vst [vmem:[#allocation10] sm:$0xf] %v391
    // Predicated region
    $region46: #{tpu_custom_call.1} parent=1 // pred_check
      _
    $region47: #{tpu_custom_call.1} parent=1 // pred_check_branch
      %394 = sbr.rel (0) target = $region49
    $region48: #{tpu_custom_call.1} parent=1 // pred_region
      %s396 = ssub.s32 64, 64
      %397 = vsyncadd [#allocation4], %s396
      %s399 = sshll.u32 [#allocation10], 4
      %s400 = int_to_ptr.vmem [resolvable:$true] %s399
      %402 = dma.vmem_to_hbm [thread:$0]  %s400, 64, %s7, [#allocation4]
    $region49: #{tpu_custom_call.1} parent=1 // pred_fallthru
      _
    // Predicated region
    $region50: #{tpu_custom_call.1} parent=1 // pred_check
      _
    $region51: #{tpu_custom_call.1} parent=1 // pred_check_branch
      %404 = sbr.rel (0) target = $region53
    $region52: #{tpu_custom_call.1} parent=1 // pred_region
      %405 = dma.done [#allocation4], 64
    $region53: #{tpu_custom_call.1} parent=1 // pred_fallthru
      _
    %406 = vsyncpa [#allocation3], 1
    %407 = vsyncpa [#allocation6], 1
    %408 = vsyncpa [#allocation9], 1
    %409 = vsyncpa [#allocation4], 1

</llo_original>
